<compile_context>
chip_gen: v7x
topology: tpu7x:2x2x1
jax: 0.10.0
libtpu: 0.0.40
codegen_flags: <defaults>
</compile_context>

<pallas_src>
import functools

import jax
import jax.numpy as jnp
from jax import lax
from jax.experimental import pallas as pl
from jax.experimental.pallas import tpu as pltpu


_VMEM_BUDGET_BYTES = 12 * 1024 * 1024  # pipelined working-set target (fits all chips)
_TILE_CANDIDATES = (1024, 512, 256, 128, 64, 32, 16, 8)


def _pick_tm(n_pad: int, n_slabs: int) -> int:
    """Largest row-tile that divides n_pad and keeps the double-buffered
    working set (n_slabs (TM, n_pad) f32 slabs, x2 buffers) under budget."""
    for tm in _TILE_CANDIDATES:
        if n_pad % tm == 0 and 2 * n_slabs * tm * n_pad * 4 <= _VMEM_BUDGET_BYTES:
            return tm
    return 8


_COMPILER_PARAMS = pltpu.CompilerParams(
    dimension_semantics=("parallel",),          # row tiles are independent
    vmem_limit_bytes=32 * 1024 * 1024,
)


# ----------------------------------------------------------------------------
# forward(): row-tiled copy of the parameter
# ----------------------------------------------------------------------------
def _copy_kernel(src_ref, dst_ref):
    dst_ref[...] = src_ref[...]


def estimate_adj_forward(estimated_adj):
    n, m = estimated_adj.shape
    itemsize = jnp.dtype(estimated_adj.dtype).itemsize
    tm = n
    if n % 8 == 0:
        for cand in _TILE_CANDIDATES:
            if n % cand == 0 and 2 * 2 * cand * m * itemsize <= _VMEM_BUDGET_BYTES:
                tm = cand
                break
    return pl.pallas_call(
        _copy_kernel,
        out_shape=jax.ShapeDtypeStruct((n, m), estimated_adj.dtype),
        grid=(n // tm,),
        in_specs=[pl.BlockSpec((tm, m), lambda i: (i, 0))],
        out_specs=pl.BlockSpec((tm, m), lambda i: (i, 0)),
        compiler_params=_COMPILER_PARAMS,
    )(estimated_adj)


# ----------------------------------------------------------------------------
# normalize(): pass 1 — r_inv = (rowsum(A (+A.T)) + 1)^(-1/2), inf -> 0
# ----------------------------------------------------------------------------
def _rinv_kernel(row_ref, rinv_ref):
    rs = jnp.sum(row_ref[...].astype(jnp.float32), axis=1, keepdims=True)
    rs = rs + jnp.float32(1.0)                       # identity diagonal
    r = lax.rsqrt(rs)                                # single EUP op (vs exp/log)
    rinv_ref[...] = jnp.where(jnp.isinf(r), jnp.float32(0.0), r)


def _rinv_kernel_sym(row_ref, col_ref, rinv_ref):
    rs = jnp.sum(row_ref[...].astype(jnp.float32), axis=1, keepdims=True)
    cs = jnp.sum(col_ref[...].astype(jnp.float32), axis=0, keepdims=True)
    rs = rs + jnp.transpose(cs) + jnp.float32(1.0)
    r = lax.rsqrt(rs)
    rinv_ref[...] = jnp.where(jnp.isinf(r), jnp.float32(0.0), r)


# ----------------------------------------------------------------------------
# normalize(): pass 2 — out = r_inv[i] * (A (+A.T) + I) * r_inv[j], row tiled
# ----------------------------------------------------------------------------
def _apply_scale(a, rrow, rcol, out_ref):
    tm = a.shape[0]
    i = pl.program_id(0)
    row_ids = lax.broadcasted_iota(jnp.int32, a.shape, 0) + i * tm
    col_ids = lax.broadcasted_iota(jnp.int32, a.shape, 1)
    a = jnp.where(row_ids == col_ids, a + jnp.float32(1.0), a)  # per-tile diag only
    out_ref[...] = (rrow * a * rcol).astype(out_ref.dtype)


def _scale_kernel(row_ref, rrow_ref, rcol_ref, out_ref):
    a = row_ref[...].astype(jnp.float32)
    _apply_scale(a, rrow_ref[...], rcol_ref[...], out_ref)


def _scale_kernel_sym(row_ref, col_ref, rrow_ref, rcol_ref, out_ref):
    a = (row_ref[...].astype(jnp.float32)
         + jnp.transpose(col_ref[...].astype(jnp.float32)))     # per-tile transpose
    _apply_scale(a, rrow_ref[...], rcol_ref[...], out_ref)


def estimate_adj_normalize(estimated_adj, symmetric: bool = False):
    n = estimated_adj.shape[0]
    a = jnp.asarray(estimated_adj, jnp.float32)

    # Pad to lane-dense multiple of 128 (zero padding does not perturb the
    # un-padded block: padded rows/cols are zero; their diagonal +1 only
    # affects padded rows, which are sliced off).
    n_pad = max(128, ((n + 127) // 128) * 128)
    if n_pad != n:
        a = jnp.pad(a, ((0, n_pad - n), (0, n_pad - n)))

    n_slabs = 3 if symmetric else 2                  # row (+col) + out per tile
    tm = _pick_tm(n_pad, n_slabs)
    grid = (n_pad // tm,)

    row_spec = pl.BlockSpec((tm, n_pad), lambda i: (i, 0))
    col_spec = pl.BlockSpec((n_pad, tm), lambda i: (0, i))
    rrow_spec = pl.BlockSpec((tm, 1), lambda i: (i, 0))
    rcol_spec = pl.BlockSpec((1, n_pad), lambda i: (0, 0))

    # ---- pass 1: r_inv vector ------------------------------------------------
    rinv_shape = jax.ShapeDtypeStruct((n_pad, 1), jnp.float32)
    if symmetric:
        r_inv = pl.pallas_call(
            _rinv_kernel_sym,
            out_shape=rinv_shape,
            grid=grid,
            in_specs=[row_spec, col_spec],
            out_specs=rrow_spec,
            compiler_params=_COMPILER_PARAMS,
        )(a, a)
    else:
        r_inv = pl.pallas_call(
            _rinv_kernel,
            out_shape=rinv_shape,
            grid=grid,
            in_specs=[row_spec],
            out_specs=rrow_spec,
            compiler_params=_COMPILER_PARAMS,
        )(a)

    r_inv_cols = r_inv.reshape(1, n_pad)

    # ---- pass 2: scale row tiles ----------------------------------------------
    out_shape = jax.ShapeDtypeStruct((n_pad, n_pad), jnp.float32)
    if symmetric:
        out = pl.pallas_call(
            _scale_kernel_sym,
            out_shape=out_shape,
            grid=grid,
            in_specs=[row_spec, col_spec, rrow_spec, rcol_spec],
            out_specs=row_spec,
            compiler_params=_COMPILER_PARAMS,
        )(a, a, r_inv, r_inv_cols)
    else:
        out = pl.pallas_call(
            _scale_kernel,
            out_shape=out_shape,
            grid=grid,
            in_specs=[row_spec, rrow_spec, rcol_spec],
            out_specs=row_spec,
            compiler_params=_COMPILER_PARAMS,
        )(a, r_inv, r_inv_cols)

    if n_pad != n:
        out = out[:n, :n]
    return out


# ----------------------------------------------------------------------------
# Thin module-like wrapper mirroring EstimateAdj
# ----------------------------------------------------------------------------
class EstimateAdjPallas:
    def __init__(self, adj, symmetric: bool = False):
        # _init_estimation: the parameter is a copy of the given adjacency.
        self.estimated_adj = jnp.asarray(adj, dtype=jnp.float32)
        self.symmetric = symmetric

    def forward(self):
        return estimate_adj_forward(self.estimated_adj)

    def normalize(self):
        return estimate_adj_normalize(self.estimated_adj, self.symmetric)


# Pure-JAX reference (mirrors the torch code, incl. no 1/2 factor on A + A.T)
def _normalize_ref(adj, symmetric):
    a = adj + adj.T if symmetric else adj
    a = a + jnp.eye(a.shape[0], dtype=jnp.float32)
    rowsum = a.sum(1)
    r_inv = jnp.power(rowsum, -0.5)
    r_inv = jnp.where(jnp.isinf(r_inv), 0.0, r_inv)
    d = jnp.diag(r_inv)
    return d @ a @ d


def _make_adj(key, n):
    raw = (jax.random.uniform(key, (n, n)) < 0.05).astype(jnp.float32)
    return jnp.clip(raw + raw.T, 0.0, 1.0) * (1.0 - jnp.eye(n, dtype=jnp.float32))


if __name__ == "__main__":
    key = jax.random.PRNGKey(0)
    k1, k2 = jax.random.split(key)

    # Case 1: N multiple of 128 (exercises multi-tile grid), both symmetries.
    n1 = 384
    adj1 = _make_adj(k1, n1)
    for sym in (False, True):
        model = EstimateAdjPallas(adj1, symmetric=sym)
        out = jax.block_until_ready(model.forward())
        assert out.shape == (n1, n1) and out.dtype == jnp.float32
        assert bool(jnp.allclose(out, adj1))
        norm = jax.block_until_ready(model.normalize())
        ref = _normalize_ref(model.estimated_adj, sym)
        assert bool(jnp.allclose(norm, ref, atol=1e-5, rtol=1e-5)), f"sym={sym}"

    # Case 2: N not a multiple of 128 (exercises the padding path).
    n2 = 200
    adj2 = _make_adj(k2, n2)
    model2 = EstimateAdjPallas(adj2, symmetric=False)
    out2 = jax.block_until_ready(model2.forward())
    assert out2.shape == (n2, n2) and bool(jnp.allclose(out2, adj2))
    norm2 = jax.block_until_ready(model2.normalize())
    ref2 = _normalize_ref(model2.estimated_adj, False)
    assert bool(jnp.allclose(norm2, ref2, atol=1e-5, rtol=1e-5))

    print("KERNEL_OK")
</pallas_src>

<mosaic_0001>
module attributes {stable_mosaic.version = 11 : i64} {
  func.func @_copy_kernel(%arg0: i32, %arg1: memref<128x384xf32, #tpu.memory_space<vmem>>, %arg2: memref<128x384xf32, #tpu.memory_space<vmem>>) attributes {dimension_semantics = [#tpu.dimension_semantics<parallel>], iteration_bounds = array<i64: 3>, scalar_prefetch = 0 : i64, scratch_operands = 0 : i64, tpu.core_type = #tpu.core_type<tc>, window_params = [{transform_indices = @transform_0, window_bounds = array<i64: 128, 384>}, {transform_indices = @transform_1, window_bounds = array<i64: 128, 384>}]} {
    %c0 = arith.constant 0 : index
    %c0_0 = arith.constant 0 : index
    %0 = vector.load %arg1[%c0, %c0_0] : memref<128x384xf32, #tpu.memory_space<vmem>>, vector<128x384xf32>
    %c0_1 = arith.constant 0 : index
    %c0_2 = arith.constant 0 : index
    %1 = vector.load %arg2[%c0_1, %c0_2] : memref<128x384xf32, #tpu.memory_space<vmem>>, vector<128x384xf32>
    tpu.vector_store %arg2[%c0_1, %c0_2], %0 {strides = array<i32>} : memref<128x384xf32, #tpu.memory_space<vmem>>, vector<128x384xf32>,
    return
  }
  func.func @transform_0(%arg0: i32) -> (i32, i32) {
    %c0_i32 = arith.constant 0 : i32
    %c0_i32_0 = arith.constant 0 : i32
    return %arg0, %c0_i32 : i32, i32
  }
  func.func @transform_1(%arg0: i32) -> (i32, i32) {
    %c0_i32 = arith.constant 0 : i32
    %c0_i32_0 = arith.constant 0 : i32
    return %arg0, %c0_i32 : i32, i32
  }
}

</mosaic_0001>

<llo_original>
// kernel: tpu_custom_call.1
$region0: #{tpu_custom_call.1}
  #allocation0 [shape = 'u32[]', space=smem, size = 0x4, offset = 0x4, fixed_abs, tag = 'smem constant byte address 0x4 - core index']
  #allocation1 [shape = 'u32[144,128]{1,0:T(1,128)}', space=vmem, size = 0x12000, scoped, tag = 'internal scratch']
  %s0 = inlined_call_operand.hbm [shape: f32[384,384], index: 0, kind: input, shape index: {}]
  %s1 = inlined_call_operand.hbm [shape: f32[384,384], index: 1, kind: output, shape index: {}]
  %s2 = sld [smem:[#allocation0]]
  $region41: #{tpu_custom_call.1} parent=0
    _
  %s4 = ssub.s32 1, %s2
  %s5 = scalar_select 0, %s4, %s2
  $region1: #{tpu_custom_call.1} parent=0
    #allocation2 [shape = 'u8[393216]{0}', space=vmem, size = 0x60000, scoped, tag = 'input window, operand 0']
    #allocation3 [shape = 's32[2]{0}', space=sflag, size = 0x8, scoped, tag = 'scoped memory for tpu_custom_call.1']
    #allocation4 [shape = 's32[2]{0}', space=sflag, size = 0x8, scoped, tag = 'scoped memory for tpu_custom_call.1']
    #allocation5 [shape = 'u8[393216]{0}', space=vmem, size = 0x60000, scoped, tag = 'output window, operand 0']
    %6 = vsyncpa [#allocation3], 0
    %s7 = scalar_lea.sflag [#allocation3], 1
    %8 = vsyncpa %s7, 0
    %9 = vsyncpa [#allocation4], 0
    %s10 = scalar_lea.sflag [#allocation4], 1
    %11 = vsyncpa %s10, 0
    loop: start=0, step=1, limit=5
    $region2: #{tpu_custom_call.1} parent=1 // loop_pre_header
      _
    $region3: #{tpu_custom_call.1} parent=1 // loop_header
      %s13 = sphi 0, %s17
      %p14 = scmp.ge.s32.totalorder %s13, 5
      %s23 = sphi 0, %s25
      %s26 = sphi 0, %s23
      %s27 = sphi 0, %s26
      %s43 = sphi 0, %s27
      %s49 = sphi 0, %s51
      %s52 = sphi 0, %s49
      %s53 = sphi 0, %s52
      %s69 = sphi 0, %s53
    $region4: #{tpu_custom_call.1} parent=1 // loop_header_branch
      %16 = sbr.rel (%p14) target = $region8
    $region5: #{tpu_custom_call.1} parent=1 // loop_body
      %s18 = ssub.s32 %s13, 1
      %s19 = ssub.s32 %s13, 2
      %s20 = sadd.s32 %s13, 1
      %s21 = ssub.s32 %s13, %s20
      %p22 = scmp.eq.s32.totalorder %s21, 0
      %s24 = sadd.s32 %s23, 1
      %s25 = scalar_select %p22, %s23, %s24
      %p28 = pneg %p22
      %p29 = scmp.eq.s32.totalorder %s13, 2
      %p30 = por %p28, %p29
      %p31 = scmp.ne.s32.totalorder %s23, %s26
      %p32 = scmp.eq.s32.totalorder %s13, 0
      %p33 = por %p31, %p32
      %p34 = scmp.ne.s32.totalorder %s23, %s26
      %p35 = scmp.eq.s32.totalorder %s18, 2
      %p36 = por %p34, %p35
      %p37 = scmp.ne.s32.totalorder %s26, %s27
      %p38 = scmp.eq.s32.totalorder %s18, 0
      %p39 = por %p37, %p38
      %p40 = scmp.ne.s32.totalorder %s26, %s27
      %p41 = scmp.eq.s32.totalorder %s19, 2
      %p42 = por %p40, %p41
      %p44 = scmp.ne.s32.totalorder %s27, %s43
      %p45 = scmp.eq.s32.totalorder %s19, 0
      %p46 = por %p44, %p45
      %s47 = ssub.s32 %s13, %s20
      %p48 = scmp.eq.s32.totalorder %s47, 0
      %s50 = sadd.s32 %s49, 1
      %s51 = scalar_select %p48, %s49, %s50
      %p54 = pneg %p48
      %p55 = scmp.eq.s32.totalorder %s13, 2
      %p56 = por %p54, %p55
      %p57 = scmp.ne.s32.totalorder %s49, %s52
      %p58 = scmp.eq.s32.totalorder %s13, 0
      %p59 = por %p57, %p58
      %p60 = scmp.ne.s32.totalorder %s49, %s52
      %p61 = scmp.eq.s32.totalorder %s18, 2
      %p62 = por %p60, %p61
      %p63 = scmp.ne.s32.totalorder %s52, %s53
      %p64 = scmp.eq.s32.totalorder %s18, 0
      %p65 = por %p63, %p64
      %p66 = scmp.ne.s32.totalorder %s52, %s53
      %p67 = scmp.eq.s32.totalorder %s19, 2
      %p68 = por %p66, %p67
      %p70 = scmp.ne.s32.totalorder %s53, %s69
      %p71 = scmp.eq.s32.totalorder %s19, 0
      %p72 = por %p70, %p71
      %p73 = scmp.le.s32.totalorder 1, %s13
      %p74 = scmp.lt.s32.totalorder %s13, 4
      %p75 = pnand %p73, %p74
      %p76 = pneg %p75
      // Predicated region
      $region9: #{tpu_custom_call.1} parent=5 // pred_check
        _
      $region10: #{tpu_custom_call.1} parent=5 // pred_check_branch
        %78 = sbr.rel (%p75) target = $region12
      $region11: #{tpu_custom_call.1} parent=5 // pred_region
        %s79 = ssub.s32 %s13, 1
      $region12: #{tpu_custom_call.1} parent=5 // pred_fallthru
        _
      %p80 = scmp.lt.s32.totalorder %s13, 3
      // Predicated region
      $region13: #{tpu_custom_call.1} parent=5 // pred_check
        %p81 = pneg %p80
      $region14: #{tpu_custom_call.1} parent=5 // pred_check_branch
        %83 = sbr.rel (%p81) target = $region16
      $region15: #{tpu_custom_call.1} parent=5 // pred_region
        // Predicated region
        $region17: #{tpu_custom_call.1} parent=15 // pred_check
          %p84 = pneg %p33
        $region18: #{tpu_custom_call.1} parent=15 // pred_check_branch
          %86 = sbr.rel (%p84) target = $region20
        $region19: #{tpu_custom_call.1} parent=15 // pred_region
          %s87 = sand.u32 %s23, 1
          %s88 = scalar_lea.sflag [#allocation3], %s87
          %s89 = sand.u32 %s23, 1
          %s90 = smul.addr %s89, 384
          %s91 = scalar_lea.vmem [#allocation2], %s90
          %s92 = smul.u32 16, %s13
          %s94 = ssub.s32 6144, 6144
          %95 = vsyncadd %s88, %s94
          %s96 = smul.addr %s92, 3
          %s97 = smul.addr %s96, 128
          %s98 = scalar_lea.hbm %s0, %s97
          %s99 = sshll.u32 %s91, 4
          %s100 = int_to_ptr.vmem [resolvable:$true] %s99
          %105 = dma.hbm_to_vmem [thread:$0]  %s98, 6144, %s100, %s88, 384, 384, 24
        $region20: #{tpu_custom_call.1} parent=15 // pred_fallthru
          _
      $region16: #{tpu_custom_call.1} parent=5 // pred_fallthru
        _
      %p106 = scmp.le.s32.totalorder 1, %s13
      %p107 = scmp.lt.s32.totalorder %s13, 4
      %p108 = pnand %p106, %p107
      %p109 = pneg %p108
      // Predicated region
      $region21: #{tpu_custom_call.1} parent=5 // pred_check
        _
      $region22: #{tpu_custom_call.1} parent=5 // pred_check_branch
        %111 = sbr.rel (%p108) target = $region24
      $region23: #{tpu_custom_call.1} parent=5 // pred_region
        %s112 = ssub.s32 %s13, 1
        %s113 = sand.u32 %s26, 1
        %s114 = scalar_lea.sflag [#allocation3], %s113
        %s115 = sand.u32 %s26, 1
        %s116 = smul.addr %s115, 384
        %s117 = scalar_lea.vmem [#allocation2], %s116
        // Predicated region
        $region25: #{tpu_custom_call.1} parent=23 // pred_check
          %p118 = pneg %p39
        $region26: #{tpu_custom_call.1} parent=23 // pred_check_branch
          %120 = sbr.rel (%p118) target = $region28
        $region27: #{tpu_custom_call.1} parent=23 // pred_region
          %121 = dma.done %s114, 6144
        $region28: #{tpu_custom_call.1} parent=23 // pred_fallthru
          _
        %s122 = sand.u32 %s26, 1
        %s123 = scalar_lea.sflag [#allocation3], %s122
        %s124 = sand.u32 %s26, 1
        %s125 = smul.addr %s124, 384
        %s126 = scalar_lea.vmem [#allocation2], %s125
        %p127 = pneg %p39
        %p128 = pneg %p36
        %p129 = pneg %p65
        %p130 = pneg %p62
        %s131 = sand.u32 %s52, 1
        %s132 = scalar_lea.sflag [#allocation4], %s131
        %s133 = sand.u32 %s52, 1
        %s134 = smul.addr %s133, 384
        %s135 = scalar_lea.vmem [#allocation5], %s134
        %s136 = smul.u32 16, %s18
        %s137 = smul.u32 16, %s18
        %v138 = vld [vmem:[%s117] sm:$0xff]
        %v139 = vld [vmem:[%s117 + $0x8] sm:$0xff]
        %v140 = vld [vmem:[%s117 + $0x10] sm:$0xff]
        %v141 = vld [vmem:[%s117 + $0x18] sm:$0xff]
        %v142 = vld [vmem:[%s117 + $0x20] sm:$0xff]
        %v143 = vld [vmem:[%s117 + $0x28] sm:$0xff]
        %v144 = vld [vmem:[%s117 + $0x30] sm:$0xff]
        %v145 = vld [vmem:[%s117 + $0x38] sm:$0xff]
        %v146 = vld [vmem:[%s117 + $0x40] sm:$0xff]
        %v147 = vld [vmem:[%s117 + $0x48] sm:$0xff]
        %v148 = vld [vmem:[%s117 + $0x50] sm:$0xff]
        %v149 = vld [vmem:[%s117 + $0x58] sm:$0xff]
        %v150 = vld [vmem:[%s117 + $0x60] sm:$0xff]
        %v151 = vld [vmem:[%s117 + $0x68] sm:$0xff]
        %v152 = vld [vmem:[%s117 + $0x70] sm:$0xff]
        %v153 = vld [vmem:[%s117 + $0x78] sm:$0xff]
        %v154 = vld [vmem:[%s117 + $0x80] sm:$0xff]
        %v155 = vld [vmem:[%s117 + $0x88] sm:$0xff]
        %v156 = vld [vmem:[%s117 + $0x90] sm:$0xff]
        %v157 = vld [vmem:[%s117 + $0x98] sm:$0xff]
        %v158 = vld [vmem:[%s117 + $0xa0] sm:$0xff]
        %v159 = vld [vmem:[%s117 + $0xa8] sm:$0xff]
        %v160 = vld [vmem:[%s117 + $0xb0] sm:$0xff]
        %v161 = vld [vmem:[%s117 + $0xb8] sm:$0xff]
        %v162 = vld [vmem:[%s117 + $0xc0] sm:$0xff]
        %v163 = vld [vmem:[%s117 + $0xc8] sm:$0xff]
        %v164 = vld [vmem:[%s117 + $0xd0] sm:$0xff]
        %v165 = vld [vmem:[%s117 + $0xd8] sm:$0xff]
        %v166 = vld [vmem:[%s117 + $0xe0] sm:$0xff]
        %v167 = vld [vmem:[%s117 + $0xe8] sm:$0xff]
        %v168 = vld [vmem:[%s117 + $0xf0] sm:$0xff]
        %v169 = vld [vmem:[%s117 + $0xf8] sm:$0xff]
        %v170 = vld [vmem:[%s117 + $0x100] sm:$0xff]
        %v171 = vld [vmem:[%s117 + $0x108] sm:$0xff]
        %v172 = vld [vmem:[%s117 + $0x110] sm:$0xff]
        %v173 = vld [vmem:[%s117 + $0x118] sm:$0xff]
        %v174 = vld [vmem:[%s117 + $0x120] sm:$0xff]
        %v175 = vld [vmem:[%s117 + $0x128] sm:$0xff]
        %v176 = vld [vmem:[%s117 + $0x130] sm:$0xff]
        %v177 = vld [vmem:[%s117 + $0x138] sm:$0xff]
        %v178 = vld [vmem:[%s117 + $0x140] sm:$0xff]
        %v179 = vld [vmem:[%s117 + $0x148] sm:$0xff]
        %v180 = vld [vmem:[%s117 + $0x150] sm:$0xff]
        %v181 = vld [vmem:[%s117 + $0x158] sm:$0xff]
        %v182 = vld [vmem:[%s117 + $0x160] sm:$0xff]
        %v183 = vld [vmem:[%s117 + $0x168] sm:$0xff]
        %v184 = vld [vmem:[%s117 + $0x170] sm:$0xff]
        %v185 = vld [vmem:[%s117 + $0x178] sm:$0xff]
        %186 = vst [vmem:[%s135] sm:$0xff] %v138
        %187 = vst [vmem:[%s135 + $0x8] sm:$0xff] %v139
        %188 = vst [vmem:[%s135 + $0x10] sm:$0xff] %v140
        %189 = vst [vmem:[%s135 + $0x18] sm:$0xff] %v141
        %190 = vst [vmem:[%s135 + $0x20] sm:$0xff] %v142
        %191 = vst [vmem:[%s135 + $0x28] sm:$0xff] %v143
        %192 = vst [vmem:[%s135 + $0x30] sm:$0xff] %v144
        %193 = vst [vmem:[%s135 + $0x38] sm:$0xff] %v145
        %194 = vst [vmem:[%s135 + $0x40] sm:$0xff] %v146
        %195 = vst [vmem:[%s135 + $0x48] sm:$0xff] %v147
        %196 = vst [vmem:[%s135 + $0x50] sm:$0xff] %v148
        %197 = vst [vmem:[%s135 + $0x58] sm:$0xff] %v149
        %198 = vst [vmem:[%s135 + $0x60] sm:$0xff] %v150
        %199 = vst [vmem:[%s135 + $0x68] sm:$0xff] %v151
        %200 = vst [vmem:[%s135 + $0x70] sm:$0xff] %v152
        %201 = vst [vmem:[%s135 + $0x78] sm:$0xff] %v153
        %202 = vst [vmem:[%s135 + $0x80] sm:$0xff] %v154
        %203 = vst [vmem:[%s135 + $0x88] sm:$0xff] %v155
        %204 = vst [vmem:[%s135 + $0x90] sm:$0xff] %v156
        %205 = vst [vmem:[%s135 + $0x98] sm:$0xff] %v157
        %206 = vst [vmem:[%s135 + $0xa0] sm:$0xff] %v158
        %207 = vst [vmem:[%s135 + $0xa8] sm:$0xff] %v159
        %208 = vst [vmem:[%s135 + $0xb0] sm:$0xff] %v160
        %209 = vst [vmem:[%s135 + $0xb8] sm:$0xff] %v161
        %210 = vst [vmem:[%s135 + $0xc0] sm:$0xff] %v162
        %211 = vst [vmem:[%s135 + $0xc8] sm:$0xff] %v163
        %212 = vst [vmem:[%s135 + $0xd0] sm:$0xff] %v164
        %213 = vst [vmem:[%s135 + $0xd8] sm:$0xff] %v165
        %214 = vst [vmem:[%s135 + $0xe0] sm:$0xff] %v166
        %215 = vst [vmem:[%s135 + $0xe8] sm:$0xff] %v167
        %216 = vst [vmem:[%s135 + $0xf0] sm:$0xff] %v168
        %217 = vst [vmem:[%s135 + $0xf8] sm:$0xff] %v169
        %218 = vst [vmem:[%s135 + $0x100] sm:$0xff] %v170
        %219 = vst [vmem:[%s135 + $0x108] sm:$0xff] %v171
        %220 = vst [vmem:[%s135 + $0x110] sm:$0xff] %v172
        %221 = vst [vmem:[%s135 + $0x118] sm:$0xff] %v173
        %222 = vst [vmem:[%s135 + $0x120] sm:$0xff] %v174
        %223 = vst [vmem:[%s135 + $0x128] sm:$0xff] %v175
        %224 = vst [vmem:[%s135 + $0x130] sm:$0xff] %v176
        %225 = vst [vmem:[%s135 + $0x138] sm:$0xff] %v177
        %226 = vst [vmem:[%s135 + $0x140] sm:$0xff] %v178
        %227 = vst [vmem:[%s135 + $0x148] sm:$0xff] %v179
        %228 = vst [vmem:[%s135 + $0x150] sm:$0xff] %v180
        %229 = vst [vmem:[%s135 + $0x158] sm:$0xff] %v181
        %230 = vst [vmem:[%s135 + $0x160] sm:$0xff] %v182
        %231 = vst [vmem:[%s135 + $0x168] sm:$0xff] %v183
        %232 = vst [vmem:[%s135 + $0x170] sm:$0xff] %v184
        %233 = vst [vmem:[%s135 + $0x178] sm:$0xff] %v185
        %s234 = sand.u32 %s52, 1
        %s235 = scalar_lea.sflag [#allocation4], %s234
        %s236 = sand.u32 %s52, 1
        %s237 = smul.addr %s236, 384
        %s238 = scalar_lea.vmem [#allocation5], %s237
        // Predicated region
        $region29: #{tpu_custom_call.1} parent=23 // pred_check
          %p239 = pneg %p62
        $region30: #{tpu_custom_call.1} parent=23 // pred_check_branch
          %241 = sbr.rel (%p239) target = $region32
        $region31: #{tpu_custom_call.1} parent=23 // pred_region
          %s242 = smul.u32 16, %s18
          %s244 = ssub.s32 6144, 6144
          %245 = vsyncadd %s235, %s244
          %s246 = smul.addr %s242, 3
          %s247 = smul.addr %s246, 128
          %s248 = scalar_lea.hbm %s1, %s247
          %s249 = sshll.u32 %s238, 4
          %s250 = int_to_ptr.vmem [resolvable:$true] %s249
          %255 = dma.vmem_to_hbm [thread:$0]  %s250, 6144, %s248, %s235, 384, 384, 24
        $region32: #{tpu_custom_call.1} parent=23 // pred_fallthru
          _
      $region24: #{tpu_custom_call.1} parent=5 // pred_fallthru
        _
      %p256 = scmp.le.s32.totalorder 2, %s13
      // Predicated region
      $region33: #{tpu_custom_call.1} parent=5 // pred_check
        %p257 = pneg %p256
      $region34: #{tpu_custom_call.1} parent=5 // pred_check_branch
        %259 = sbr.rel (%p257) target = $region36
      $region35: #{tpu_custom_call.1} parent=5 // pred_region
        %s260 = ssub.s32 %s13, 2
        // Predicated region
        $region37: #{tpu_custom_call.1} parent=35 // pred_check
          %p261 = pneg %p68
        $region38: #{tpu_custom_call.1} parent=35 // pred_check_branch
          %263 = sbr.rel (%p261) target = $region40
        $region39: #{tpu_custom_call.1} parent=35 // pred_region
          %s264 = sand.u32 %s53, 1
          %s265 = scalar_lea.sflag [#allocation4], %s264
          %s266 = sand.u32 %s53, 1
          %s267 = smul.addr %s266, 384
          %s268 = scalar_lea.vmem [#allocation5], %s267
          %269 = dma.done %s265, 6144
        $region40: #{tpu_custom_call.1} parent=35 // pred_fallthru
          _
      $region36: #{tpu_custom_call.1} parent=5 // pred_fallthru
        _
    $region6: #{tpu_custom_call.1} parent=1 // loop_footer
      %s17 = sadd.s32 1, %s13
    $region7: #{tpu_custom_call.1} parent=1 // loop_footer_branch
      %12 = sbr.rel target = $region3
    $region8: #{tpu_custom_call.1} parent=1 // loop_exit
      _
    %270 = vsyncpa [#allocation3], 1
    %s271 = scalar_lea.sflag [#allocation3], 1
    %272 = vsyncpa %s271, 1
    %273 = vsyncpa [#allocation4], 1
    %s274 = scalar_lea.sflag [#allocation4], 1
    %275 = vsyncpa %s274, 1

</llo_original>
